<compile_context>
chip_gen: v6e
topology: v6e:2x2x1
jax: 0.10.0
libtpu: 0.0.40
codegen_flags: <defaults>
</compile_context>

<pallas_src>
import math

import jax
import jax.numpy as jnp
from jax.experimental import pallas as pl
from jax.experimental.pallas import tpu as pltpu

_LANE = 128
_SMALL_INPUT_BYTES = 1 << 20       # below this, use plain fused XLA
_SPLIT_MIN_BYTES = 4 << 20         # above this, force >= 2 row blocks (v7x 2 TCs)


def _normalize_kernel(x_ref, mean_ref, inv_std_ref, o_ref):
    # x_ref:       (tile_r, tile_f) in x dtype
    # mean_ref:    (1, tile_f) float32 -> broadcasts over rows
    # inv_std_ref: (1, tile_f) float32
    x = x_ref[...].astype(jnp.float32)
    o_ref[...] = ((x - mean_ref[...]) * inv_std_ref[...]).astype(o_ref.dtype)


def _tpu_memory_params():
    """(target_block_bytes, vmem_limit_bytes) tuned per TPU generation."""
    cap = None
    try:
        info = pltpu.get_tpu_info()
        for attr in ("vmem_capacity_bytes", "vmem_bytes", "vmem_size_bytes"):
            v = getattr(info, attr, None)
            if v:
                cap = int(v)
                break
    except Exception:
        cap = None
    if cap is None:
        cap = 64 << 20  # conservative: assume smallest (v7x per-TC)
    if cap >= 96 << 20:            # v5e / v6e: 128 MiB physical VMEM
        return 8 << 20, 48 << 20
    return 4 << 20, 40 << 20       # v7x: 64 MiB physical per TensorCore


def running_normalizer_forward(x, running_mean, running_var, epsilon,
                               *, donate_input=False,
                               small_input_fallback=True,
                               _target_block_bytes=None,
                               _split_min_bytes=None):
    """Pallas implementation of RunningNormalizer.forward with frozen stats.

    x:            (B, *feature_shape) array
    running_mean: feature_shape array
    running_var:  feature_shape array
    epsilon:      python float
    """
    orig_shape = x.shape
    B = orig_shape[0]
    F = int(math.prod(orig_shape[1:]))
    itemsize = jnp.dtype(x.dtype).itemsize
    total_bytes = B * F * itemsize
    x2 = x.reshape(B, F)

    # --- tiny f32 precompute (one-off; not the "pre-scale big input" pattern)
    mean_f32 = running_mean.reshape(F).astype(jnp.float32)
    inv_std = 1.0 / (jnp.sqrt(running_var.reshape(F).astype(jnp.float32))
                     + jnp.float32(epsilon))

    # --- small-input fallback: fused XLA beats any pallas_call launch --------
    if small_input_fallback and total_bytes < _SMALL_INPUT_BYTES:
        y = ((x2.astype(jnp.float32) - mean_f32.reshape(1, F))
             * inv_std.reshape(1, F)).astype(x.dtype)
        return y.reshape(orig_shape)

    target_block_bytes, vmem_limit = _tpu_memory_params()
    if _target_block_bytes is not None:
        target_block_bytes = int(_target_block_bytes)
    split_min_bytes = (_SPLIT_MIN_BYTES if _split_min_bytes is None
                       else int(_split_min_bytes))

    # --- layout: lane-dense when cheap, otherwise full-extent feature block --
    if _LANE % F == 0 and (B * F) % _LANE == 0 and F < _LANE:
        # tiny feature dim: fold batch into lanes (free row-major reshape)
        layout = "reshape"
        rep = _LANE // F
        rows, width = (B * F) // _LANE, _LANE
        xl = x2.reshape(rows, _LANE)
        mean2d = jnp.tile(mean_f32, rep).reshape(1, _LANE)
        inv2d = jnp.tile(inv_std, rep).reshape(1, _LANE)
    else:
        # direct: last block dim = F (full extent). Legal for any F; Mosaic
        # lane-pads internally and uses masked stores on the last lane group.
        layout = "direct"
        rows, width = B, F
        xl = x2
        mean2d = mean_f32.reshape(1, F)
        inv2d = inv_std.reshape(1, F)

    sublane = max(8, 32 // itemsize)          # 8 for f32, 16 for bf16

    # --- feature tile: prefer the full feature extent (contiguous DMA, wide
    #     unmasked vst); only tile for extremely wide F that can't fit VMEM. --
    if sublane * width * itemsize > target_block_bytes and width > _LANE:
        max_tile_f = max(_LANE,
                         (target_block_bytes // (sublane * itemsize))
                         // _LANE * _LANE)
        tile_f = min(max_tile_f, pl.cdiv(width, _LANE) * _LANE)
        if width % _LANE == 0:
            # prefer a divisor of the lane-group count -> no ragged feat block
            groups = width // _LANE
            best = 1
            for d in range(1, groups + 1):
                if groups % d == 0 and d * _LANE <= max_tile_f:
                    best = d
            tile_f = best * _LANE
        if tile_f >= width:
            tile_f = width
    else:
        tile_f = width

    # --- row tile: target_block_bytes of x per block, sublane-aligned --------
    target_rows = max(sublane, target_block_bytes // (tile_f * itemsize))
    tile_r = max(sublane, (target_rows // sublane) * sublane)
    if rows <= tile_r:
        tile_r = rows                          # single full-extent block
    # ensure >= 2 parallel row blocks on non-tiny inputs (v7x has 2 TCs)
    if total_bytes > split_min_bytes and rows > sublane:
        half = pl.cdiv(rows, 2)
        cap = max(sublane, (half // sublane) * sublane)
        if tile_r > cap:
            tile_r = cap

    grid = (pl.cdiv(rows, tile_r), pl.cdiv(width, tile_f))

    extra = {}
    if donate_input:
        # out shape/dtype == x shape/dtype (no padding anywhere), so aliasing
        # is always valid; caller should donate x for it to pay off.
        extra["input_output_aliases"] = {0: 0}

    out = pl.pallas_call(
        _normalize_kernel,
        out_shape=jax.ShapeDtypeStruct((rows, width), x.dtype),
        grid=grid,
        in_specs=[
            pl.BlockSpec((tile_r, tile_f), lambda i, j: (i, j)),  # x
            pl.BlockSpec((1, tile_f), lambda i, j: (0, j)),       # mean (f32)
            pl.BlockSpec((1, tile_f), lambda i, j: (0, j)),       # inv_std (f32)
        ],
        out_specs=pl.BlockSpec((tile_r, tile_f), lambda i, j: (i, j)),
        compiler_params=pltpu.CompilerParams(
            dimension_semantics=("parallel", "parallel"),
            vmem_limit_bytes=vmem_limit,
        ),
        **extra,
    )(xl, mean2d, inv2d)

    if layout == "reshape":
        out = out.reshape(B, F)
    return out.reshape(orig_shape)


# --- plain-JAX glue replicating RunningMeanStd.update_from_moments (only used
#     to give the demo non-trivial stats; forward() with freeze_stats=True
#     never executes the update path) ----------------------------------------
# TODO(synk): the unfrozen-stats update path (batch mean/var reduction + Welford
# combine) is left in plain JAX since forward() with freeze_stats=True (the
# default) never executes it.
def update_from_moments(mean, var, count, batch_mean, batch_var, batch_size):
    delta = batch_mean - mean
    tot_count = count + batch_size
    new_mean = mean + delta * batch_size / tot_count
    m_a = var * count
    m_b = batch_var * batch_size
    m_2 = m_a + m_b + jnp.square(delta) * count * batch_size / tot_count
    new_var = m_2 / tot_count
    new_count = batch_size + count
    return new_mean, new_var, new_count


def _reference(x, mean, var, eps):
    # Exact PyTorch formula (division form) in f32.
    feat_shape = x.shape[1:]
    m = mean.reshape((1,) + feat_shape).astype(jnp.float32)
    v = var.reshape((1,) + feat_shape).astype(jnp.float32)
    return ((x.astype(jnp.float32) - m)
            / (jnp.sqrt(v) + jnp.float32(eps))).astype(x.dtype)


if __name__ == "__main__":
    EPS = 1e-8
    dtype = jnp.float32
    key = jax.random.PRNGKey(0)
    kx, ku, k2, k3, k4, k5 = jax.random.split(key, 6)

    # --- demo matching the module: vector observations, batch=8, features=32 -
    B, F = 8, 32
    x = jax.random.normal(kx, (B, F), dtype=dtype) * 2.0 + 0.5

    # __init__ state: mean=0, var=1, count=eps (python float avoids x64 issues)
    running_mean = jnp.zeros((F,), dtype=dtype)
    running_var = jnp.ones((F,), dtype=dtype)
    running_count = float(EPS)

    # manual_stat_update with a deterministic batch so stats are non-trivial
    upd = jax.random.normal(ku, (16, F), dtype=dtype) * 3.0 - 1.0
    running_mean, running_var, running_count = update_from_moments(
        running_mean, running_var, running_count,
        jnp.mean(upd, axis=0),
        jnp.var(upd, axis=0, ddof=1),   # torch.var default is unbiased
        upd.shape[0],
    )

    # force the Pallas path at demo scale (production default falls back to a
    # fused XLA op below ~1 MiB)
    y = running_normalizer_forward(x, running_mean, running_var, EPS,
                                   small_input_fallback=False)
    y = jax.block_until_ready(y)
    y_ref = _reference(x, running_mean, running_var, EPS)
    assert y.shape == (B, F) and y.dtype == dtype
    assert jnp.allclose(y, y_ref, rtol=1e-5, atol=1e-6)

    # small-input fallback path (default behaviour at this size)
    y_fb = jax.block_until_ready(
        running_normalizer_forward(x, running_mean, running_var, EPS))
    assert jnp.allclose(y_fb, y_ref, rtol=1e-5, atol=1e-6)

    # --- extra small checks exercising the other layouts / tiling paths ------
    # direct path, F multiple of 128
    xb = jax.random.normal(k2, (8, 256), dtype=dtype)
    mb = jnp.linspace(-1.0, 1.0, 256, dtype=dtype)
    vb = jnp.linspace(0.5, 2.0, 256, dtype=dtype)
    yb = jax.block_until_ready(running_normalizer_forward(
        xb, mb, vb, EPS, small_input_fallback=False))
    assert jnp.allclose(yb, _reference(xb, mb, vb, EPS), rtol=1e-5, atol=1e-6)

    # full-extent-F path (F=96, not a multiple of 128) — no padding copies
    xc = jax.random.normal(k3, (16, 96), dtype=dtype)
    mc = jnp.linspace(-2.0, 2.0, 96, dtype=dtype)
    vc = jnp.linspace(0.25, 4.0, 96, dtype=dtype)
    yc = jax.block_until_ready(running_normalizer_forward(
        xc, mc, vc, EPS, small_input_fallback=False))
    assert jnp.allclose(yc, _reference(xc, mc, vc, EPS), rtol=1e-5, atol=1e-6)

    # ragged last row block (rows not a multiple of tile_r) via tiny block size
    xd = jax.random.normal(k4, (200, 256), dtype=dtype)
    yd = jax.block_until_ready(running_normalizer_forward(
        xd, mb, vb, EPS, small_input_fallback=False,
        _target_block_bytes=64 * 256 * 4))
    assert jnp.allclose(yd, _reference(xd, mb, vb, EPS), rtol=1e-5, atol=1e-6)

    # feature-tiled path + ragged rows (forced with a very small block budget)
    ye = jax.block_until_ready(running_normalizer_forward(
        xd, mb, vb, EPS, small_input_fallback=False,
        _target_block_bytes=8 * 128 * 4))
    assert jnp.allclose(ye, _reference(xd, mb, vb, EPS), rtol=1e-5, atol=1e-6)

    # forced >=2 row blocks (v7x two-TensorCore rule) via split threshold = 0
    xf = jax.random.normal(k5, (64, 256), dtype=dtype)
    yf = jax.block_until_ready(running_normalizer_forward(
        xf, mb, vb, EPS, small_input_fallback=False, _split_min_bytes=0))
    assert jnp.allclose(yf, _reference(xf, mb, vb, EPS), rtol=1e-5, atol=1e-6)

    # bf16 inputs (stats kept in f32 inside the kernel)
    xg = jax.random.normal(k5, (32, 256), dtype=jnp.bfloat16)
    yg = jax.block_until_ready(running_normalizer_forward(
        xg, mb, vb, EPS, small_input_fallback=False))
    assert yg.dtype == jnp.bfloat16
    assert jnp.allclose(yg.astype(jnp.float32),
                        _reference(xg, mb, vb, EPS).astype(jnp.float32),
                        rtol=2e-2, atol=2e-2)

    print("KERNEL_OK")
</pallas_src>

<mosaic_0001>
module attributes {stable_mosaic.version = 11 : i64} {
  func.func @_normalize_kernel(%arg0: i32, %arg1: i32, %arg2: memref<2x128xf32, #tpu.memory_space<vmem>>, %arg3: memref<1x128xf32, #tpu.memory_space<vmem>>, %arg4: memref<1x128xf32, #tpu.memory_space<vmem>>, %arg5: memref<2x128xf32, #tpu.memory_space<vmem>>) attributes {dimension_semantics = [#tpu.dimension_semantics<parallel>, #tpu.dimension_semantics<parallel>], iteration_bounds = array<i64: 1, 1>, scalar_prefetch = 0 : i64, scratch_operands = 0 : i64, tpu.core_type = #tpu.core_type<tc>, window_params = [{transform_indices = @transform_0, window_bounds = array<i64: 2, 128>}, {transform_indices = @transform_1, window_bounds = array<i64: 1, 128>}, {transform_indices = @transform_2, window_bounds = array<i64: 1, 128>}, {transform_indices = @transform_3, window_bounds = array<i64: 2, 128>}]} {
    %c0 = arith.constant 0 : index
    %c0_0 = arith.constant 0 : index
    %0 = vector.load %arg2[%c0, %c0_0] : memref<2x128xf32, #tpu.memory_space<vmem>>, vector<2x128xf32>
    %c0_1 = arith.constant 0 : index
    %c0_2 = arith.constant 0 : index
    %1 = vector.load %arg3[%c0_1, %c0_2] : memref<1x128xf32, #tpu.memory_space<vmem>>, vector<1x128xf32>
    %2 = vector.broadcast %1 : vector<1x128xf32> to vector<2x128xf32>
    %3 = arith.subf %0, %2 : vector<2x128xf32>
    %c0_3 = arith.constant 0 : index
    %c0_4 = arith.constant 0 : index
    %4 = vector.load %arg4[%c0_3, %c0_4] : memref<1x128xf32, #tpu.memory_space<vmem>>, vector<1x128xf32>
    %5 = vector.broadcast %4 : vector<1x128xf32> to vector<2x128xf32>
    %6 = arith.mulf %3, %5 : vector<2x128xf32>
    %c0_5 = arith.constant 0 : index
    %c0_6 = arith.constant 0 : index
    %7 = vector.load %arg5[%c0_5, %c0_6] : memref<2x128xf32, #tpu.memory_space<vmem>>, vector<2x128xf32>
    tpu.vector_store %arg5[%c0_5, %c0_6], %6 {strides = array<i32>} : memref<2x128xf32, #tpu.memory_space<vmem>>, vector<2x128xf32>,
    return
  }
  func.func @transform_0(%arg0: i32, %arg1: i32) -> (i32, i32) {
    %c0_i32 = arith.constant 0 : i32
    return %arg0, %arg1 : i32, i32
  }
  func.func @transform_1(%arg0: i32, %arg1: i32) -> (i32, i32) {
    %c0_i32 = arith.constant 0 : i32
    %c0_i32_0 = arith.constant 0 : i32
    return %c0_i32, %arg1 : i32, i32
  }
  func.func @transform_2(%arg0: i32, %arg1: i32) -> (i32, i32) {
    %c0_i32 = arith.constant 0 : i32
    %c0_i32_0 = arith.constant 0 : i32
    return %c0_i32, %arg1 : i32, i32
  }
  func.func @transform_3(%arg0: i32, %arg1: i32) -> (i32, i32) {
    %c0_i32 = arith.constant 0 : i32
    return %arg0, %arg1 : i32, i32
  }
}

</mosaic_0001>

<llo_original>
// kernel: tpu_custom_call.1
$region0: #{tpu_custom_call.1}
  #allocation0 [shape = 'u32[]', space=smem, size = 0x4, offset = 0x4, fixed_abs, tag = 'smem constant byte address 0x4 - core index']
  #allocation1 [shape = 'u32[144,128]{1,0:T(1,128)}', space=vmem, size = 0x12000, scoped, tag = 'internal scratch']
  %s0 = inlined_call_operand.hbm [shape: f32[2,128], index: 0, kind: input, shape index: {}]
  %s1 = inlined_call_operand.vmem [shape: f32[1,128], index: 1, kind: input, shape index: {}]
  %s2 = inlined_call_operand.vmem [shape: f32[1,128], index: 2, kind: input, shape index: {}]
  %s3 = inlined_call_operand.hbm [shape: f32[2,128], index: 3, kind: output, shape index: {}]
  %s4 = sld [smem:[#allocation0]]
  $region26: #{tpu_custom_call.1} parent=0
    _
  %s6 = ssub.s32 1, %s4
  %s7 = scalar_select 0, %s6, %s4
  $region1: #{tpu_custom_call.1} parent=0
    #allocation2 [shape = 'u8[1024]{0}', space=vmem, size = 0x400, scoped, tag = 'input window, operand 0, single buffered']
    #allocation3 [shape = 's32[1]{0}', space=sflag, size = 0x4, scoped, tag = 'scoped memory for tpu_custom_call.1']
    #allocation4 [shape = 's32[1]{0}', space=sflag, size = 0x4, scoped, tag = 'scoped memory for tpu_custom_call.1']
    #allocation5 [shape = 'u8[1024]{0}', space=vmem, size = 0x400, scoped, tag = 'output window, operand 0, single buffered']
    %8 = vsyncpa [#allocation3], 0
    %9 = vsyncpa [#allocation4], 0
    // Predicated region
    $region2: #{tpu_custom_call.1} parent=1 // pred_check
      _
    $region3: #{tpu_custom_call.1} parent=1 // pred_check_branch
      %11 = sbr.rel (0) target = $region5
    $region4: #{tpu_custom_call.1} parent=1 // pred_region
      %s13 = ssub.s32 32, 32
      %14 = vsyncadd [#allocation3], %s13
      %s16 = sshll.u32 [#allocation2], 4
      %s17 = int_to_ptr.vmem [resolvable:$true] %s16
      %19 = dma.hbm_to_vmem [thread:$0]  %s0, 32, %s17, [#allocation3]
    $region5: #{tpu_custom_call.1} parent=1 // pred_fallthru
      _
    // Predicated region
    $region6: #{tpu_custom_call.1} parent=1 // pred_check
      _
    $region7: #{tpu_custom_call.1} parent=1 // pred_check_branch
      %21 = sbr.rel (0) target = $region9
    $region8: #{tpu_custom_call.1} parent=1 // pred_region
      _
    $region9: #{tpu_custom_call.1} parent=1 // pred_fallthru
      _
    // Predicated region
    $region10: #{tpu_custom_call.1} parent=1 // pred_check
      _
    $region11: #{tpu_custom_call.1} parent=1 // pred_check_branch
      %23 = sbr.rel (0) target = $region13
    $region12: #{tpu_custom_call.1} parent=1 // pred_region
      _
    $region13: #{tpu_custom_call.1} parent=1 // pred_fallthru
      _
    // Predicated region
    $region14: #{tpu_custom_call.1} parent=1 // pred_check
      _
    $region15: #{tpu_custom_call.1} parent=1 // pred_check_branch
      %25 = sbr.rel (0) target = $region17
    $region16: #{tpu_custom_call.1} parent=1 // pred_region
      %26 = dma.done [#allocation3], 32
    $region17: #{tpu_custom_call.1} parent=1 // pred_fallthru
      _
    %v27 = vld [vmem:[#allocation2] sm:$0x3]
    %v28 = vld [vmem:[%s1] sm:$0x1]
    %v30 = vlaneseq
    %v31 = vshrl.u32 %v30, 7
    %v32 = vsub.s32 0, %v31
    %v33 = vrot.slane %v28, %v32
    %v35 = vsub.f32 %v27, %v33
    %v36 = vld [vmem:[%s2] sm:$0x1]
    %v38 = vlaneseq
    %v39 = vshrl.u32 %v38, 7
    %v40 = vsub.s32 0, %v39
    %v41 = vrot.slane %v36, %v40
    %v43 = vmul.f32 %v35, %v41
    %44 = vst [vmem:[#allocation5] sm:$0x3] %v43
    // Predicated region
    $region18: #{tpu_custom_call.1} parent=1 // pred_check
      _
    $region19: #{tpu_custom_call.1} parent=1 // pred_check_branch
      %46 = sbr.rel (0) target = $region21
    $region20: #{tpu_custom_call.1} parent=1 // pred_region
      %s48 = ssub.s32 32, 32
      %49 = vsyncadd [#allocation4], %s48
      %s51 = sshll.u32 [#allocation5], 4
      %s52 = int_to_ptr.vmem [resolvable:$true] %s51
      %54 = dma.vmem_to_hbm [thread:$0]  %s52, 32, %s3, [#allocation4]
    $region21: #{tpu_custom_call.1} parent=1 // pred_fallthru
      _
    // Predicated region
    $region22: #{tpu_custom_call.1} parent=1 // pred_check
      _
    $region23: #{tpu_custom_call.1} parent=1 // pred_check_branch
      %56 = sbr.rel (0) target = $region25
    $region24: #{tpu_custom_call.1} parent=1 // pred_region
      %57 = dma.done [#allocation4], 32
    $region25: #{tpu_custom_call.1} parent=1 // pred_fallthru
      _
    %58 = vsyncpa [#allocation3], 1
    %59 = vsyncpa [#allocation4], 1

</llo_original>
